<compile_context>
chip_gen: v5e
topology: v5e:2x2
jax: 0.10.0
libtpu: 0.0.40
codegen_flags: <defaults>
</compile_context>

<pallas_src>
import jax
import jax.numpy as jnp
from jax import lax
from jax.experimental import pallas as pl
from jax.experimental.pallas import tpu as pltpu


def _round_up(x, m):
    return ((x + m - 1) // m) * m


def _round_down(x, m):
    return (x // m) * m


def _chunk_rows(*dtypes):
    """Rows per inner chunk: 8 for f32, 16 for bf16/f16, 32 for int8/bool."""
    item = min(max(1, min(4, jnp.dtype(d).itemsize)) for d in dtypes)
    return 8 * (4 // item)


def _build_kernel(*, tm, tn, chunk, m_valid, n_valid,
                  needs_row_mask, needs_col_mask):
    acc_rows = 8
    n_sub = tm // chunk

    def kernel(xp_ref, xg_ref, a_ref, out_ref, acc_ref):
        j = pl.program_id(1)

        # Zero the per-row-block accumulator at the start of each reduction
        # sweep over the column axis.
        @pl.when(j == 0)
        def _init():
            acc_ref[...] = jnp.zeros_like(acc_ref)

        col_ok = None
        if needs_col_mask:
            col = j * tn + lax.broadcasted_iota(jnp.int32, (1, tn), 1)
            col_ok = col < n_valid
        row_base = None
        if needs_row_mask:
            row_base = pl.program_id(0) * tm

        def tile_chunk(start):
            sl = pl.ds(start, chunk)
            xp = xp_ref[sl, :].astype(jnp.float32)
            xg = xg_ref[sl, :].astype(jnp.float32)
            a = a_ref[sl, :].astype(jnp.float32)
            d = a * (xg - xp)
            sq = d * d
            if needs_row_mask or needs_col_mask:
                if needs_row_mask:
                    row = (row_base + start
                           + lax.broadcasted_iota(jnp.int32, (chunk, 1), 0))
                    ok = row < m_valid
                    if needs_col_mask:
                        ok = jnp.logical_and(ok, col_ok)
                else:
                    ok = col_ok
                # where() (not multiply) so garbage in OOB tail rows/cols --
                # even NaN/Inf -- is cleanly dropped.
                sq = jnp.where(ok, sq, jnp.float32(0.0))
            # Fold packed-dtype chunks (16/32 rows) down to 8 accumulator rows
            # with plain vreg adds (static sublane-aligned slices of f32 data).
            if chunk > acc_rows:
                folded = sq[0:acc_rows, :]
                for g in range(1, chunk // acc_rows):
                    folded = folded + sq[g * acc_rows:(g + 1) * acc_rows, :]
                sq = folded
            return sq

        if n_sub == 1:
            part = tile_chunk(0)
        else:
            def body(r, carry):
                return carry + tile_chunk(pl.multiple_of(r * chunk, chunk))
            part = lax.fori_loop(0, n_sub, body,
                                 jnp.zeros((acc_rows, tn), jnp.float32),
                                 unroll=2)
        acc_ref[...] += part

        # Finalize this row block: fold the (8, tn) accumulator into a
        # lane-dense (8, 128) partial (pure vreg adds, no cross-lane reduce)
        # and write it out once.
        @pl.when(j == pl.num_programs(1) - 1)
        def _finalize():
            acc = acc_ref[...]
            folded = acc[:, 0:128]
            for c in range(1, tn // 128):
                folded = folded + acc[:, c * 128:(c + 1) * 128]
            out_ref[...] = folded[None]

    return kernel


def my_loss(x_pred, x_gt, u, v, a, lam, length, *, tile_m=512, tile_n=2048):
    """Pallas implementation of MyLoss.forward. Returns a float32 scalar."""
    assert x_pred.shape == x_gt.shape == a.shape and x_pred.ndim == 2
    M, N = x_pred.shape

    chunk = _chunk_rows(x_pred.dtype, x_gt.dtype, a.dtype)

    # Tiny-dim fallback only: pad up to one minimal tile (negligible traffic).
    # A is zero-padded, so padded entries contribute nothing to the loss.
    if M < chunk or N < 128:
        mp, np_ = max(M, chunk), max(N, 128)
        pad = lambda x: jnp.pad(x, ((0, mp - M), (0, np_ - N)))
        x_pred, x_gt, a = pad(x_pred), pad(x_gt), pad(a)
        M, N = mp, np_

    # Tile sizes: multiples of (chunk, 128), never larger than the array dims
    # (ragged tails are handled by boundary blocks + in-kernel masks).
    tm = max(chunk, min(_round_down(tile_m, chunk), _round_down(M, chunk)))
    tn = max(128, min(_round_down(tile_n, 128), _round_down(N, 128)))

    gm = pl.cdiv(M, tm)
    # Guarantee >= 2 row blocks when M allows it so both v7x TCs get work.
    if gm < 2:
        cand = _round_up(pl.cdiv(M, 2), chunk)
        if cand < tm:
            tm = cand
            gm = pl.cdiv(M, tm)
    gn = pl.cdiv(N, tn)

    needs_row_mask = (M % tm) != 0
    needs_col_mask = (N % tn) != 0

    kernel = _build_kernel(tm=tm, tn=tn, chunk=chunk, m_valid=M, n_valid=N,
                           needs_row_mask=needs_row_mask,
                           needs_col_mask=needs_col_mask)

    # Generation-aware VMEM budget: double-buffered native-dtype input tiles
    # + small scratch/output, with a little margin.
    in_bytes = sum(jnp.dtype(x.dtype).itemsize for x in (x_pred, x_gt, a))
    vmem_need = 2 * tm * tn * in_bytes + 8 * tn * 4 + 2 * 8 * 128 * 4
    vmem_limit = int(max(vmem_need + (2 << 20), 16 << 20))

    tile_spec = pl.BlockSpec((tm, tn), lambda i, j: (i, j))

    partials = pl.pallas_call(
        kernel,
        out_shape=jax.ShapeDtypeStruct((gm, 8, 128), jnp.float32),
        grid=(gm, gn),
        in_specs=[tile_spec, tile_spec, tile_spec],
        out_specs=pl.BlockSpec((1, 8, 128), lambda i, j: (i, 0, 0)),
        scratch_shapes=[pltpu.VMEM((8, tn), jnp.float32)],
        compiler_params=pltpu.CompilerParams(
            dimension_semantics=("parallel", "arbitrary"),
            vmem_limit_bytes=vmem_limit,
        ),
    )(x_pred, x_gt, a)

    # Tiny final collapse + scalar terms in the wrapper (XLA fuses these).
    length_f = jnp.asarray(length, jnp.float32)
    lam_f = jnp.asarray(lam, jnp.float32)
    match_loss = (0.5 / length_f) * jnp.sum(partials)
    norm_loss = lam_f * (jnp.sum(jnp.square(u.astype(jnp.float32)))
                         + jnp.sum(jnp.square(v.astype(jnp.float32))))
    return match_loss + norm_loss


def _reference(x_pred, x_gt, u, v, a, lam, length):
    xp = x_pred.astype(jnp.float32)
    xg = x_gt.astype(jnp.float32)
    af = a.astype(jnp.float32)
    match_loss = 1.0 / length * 0.5 * jnp.sum(jnp.square(af * (xg - xp)))
    norm_loss = lam * (jnp.sum(jnp.square(u.astype(jnp.float32)))
                       + jnp.sum(jnp.square(v.astype(jnp.float32))))
    return match_loss + norm_loss


if __name__ == "__main__":
    key = jax.random.PRNGKey(0)

    def run_case(M, N, K, dtype_x=jnp.float32, dtype_a=jnp.float32,
                 lam=0.1, **tile_kw):
        ks = jax.random.split(key, 5)
        x_gt = jax.random.normal(ks[0], (M, N), jnp.float32).astype(dtype_x)
        x_pred = jax.random.normal(ks[1], (M, N), jnp.float32).astype(dtype_x)
        u = jax.random.normal(ks[2], (M, K), jnp.float32)
        v = jax.random.normal(ks[3], (N, K), jnp.float32)
        a = (jax.random.uniform(ks[4], (M, N)) > 0.5).astype(dtype_a)
        length = float(M * N)
        out = jax.block_until_ready(
            my_loss(x_pred, x_gt, u, v, a, lam, length, **tile_kw))
        ref = _reference(x_pred, x_gt, u, v, a, lam, length)
        assert jnp.allclose(out, ref, rtol=1e-4, atol=1e-4), (out, ref)

    # Aligned shapes, default (large) tiles; row axis forced to >= 2 blocks.
    run_case(16, 256, 8)
    # Multi-tile grid with a ragged column tail (in-kernel masking, no pad).
    run_case(48, 320, 16, lam=0.05, tile_m=16, tile_n=128)
    # Narrow dtypes: bf16 X and int8 mask A (dtype-aware 32-row chunks).
    run_case(64, 256, 8, dtype_x=jnp.bfloat16, dtype_a=jnp.int8)

    print("KERNEL_OK")
</pallas_src>

<mosaic_0001>
module attributes {stable_mosaic.version = 11 : i64} {
  func.func @kernel(%arg0: i32, %arg1: i32, %arg2: memref<8x256xf32, #tpu.memory_space<vmem>>, %arg3: memref<8x256xf32, #tpu.memory_space<vmem>>, %arg4: memref<8x256xf32, #tpu.memory_space<vmem>>, %arg5: memref<1x8x128xf32, #tpu.memory_space<vmem>>, %arg6: memref<8x256xf32, #tpu.memory_space<vmem>>) attributes {dimension_semantics = [#tpu.dimension_semantics<parallel>, #tpu.dimension_semantics<arbitrary>], iteration_bounds = array<i64: 2, 1>, scalar_prefetch = 0 : i64, scratch_operands = 1 : i64, tpu.core_type = #tpu.core_type<tc>, window_params = [{transform_indices = @transform_0, window_bounds = array<i64: 8, 256>}, {transform_indices = @transform_1, window_bounds = array<i64: 8, 256>}, {transform_indices = @transform_2, window_bounds = array<i64: 8, 256>}, {transform_indices = @transform_3, window_bounds = array<i64: 1, 8, 128>}]} {
    %c0_i32 = arith.constant 0 : i32
    %0 = arith.cmpi eq, %arg1, %c0_i32 : i32
    %1 = arith.extui %0 : i1 to i32
    %c0_i32_0 = arith.constant 0 : i32
    %2 = arith.cmpi ne, %1, %c0_i32_0 : i32
    scf.if %2 {
      %cst = arith.constant 0.000000e+00 : f32
      %15 = vector.broadcast %cst : f32 to vector<8x256xf32>
      %c0_12 = arith.constant 0 : index
      %c0_13 = arith.constant 0 : index
      %16 = vector.load %arg6[%c0_12, %c0_13] : memref<8x256xf32, #tpu.memory_space<vmem>>, vector<8x256xf32>
      tpu.vector_store %arg6[%c0_12, %c0_13], %15 {strides = array<i32>} : memref<8x256xf32, #tpu.memory_space<vmem>>, vector<8x256xf32>,
    } else {
    }
    %c0 = arith.constant 0 : index
    %c0_1 = arith.constant 0 : index
    %3 = vector.load %arg2[%c0, %c0_1] : memref<8x256xf32, #tpu.memory_space<vmem>>, vector<8x256xf32>
    %c0_2 = arith.constant 0 : index
    %c0_3 = arith.constant 0 : index
    %4 = vector.load %arg3[%c0_2, %c0_3] : memref<8x256xf32, #tpu.memory_space<vmem>>, vector<8x256xf32>
    %c0_4 = arith.constant 0 : index
    %c0_5 = arith.constant 0 : index
    %5 = vector.load %arg4[%c0_4, %c0_5] : memref<8x256xf32, #tpu.memory_space<vmem>>, vector<8x256xf32>
    %6 = arith.subf %4, %3 : vector<8x256xf32>
    %7 = arith.mulf %5, %6 : vector<8x256xf32>
    %8 = arith.mulf %7, %7 : vector<8x256xf32>
    %c0_6 = arith.constant 0 : index
    %c0_7 = arith.constant 0 : index
    %9 = vector.load %arg6[%c0_6, %c0_7] : memref<8x256xf32, #tpu.memory_space<vmem>>, vector<8x256xf32>
    %10 = arith.addf %9, %8 : vector<8x256xf32>
    %c0_8 = arith.constant 0 : index
    %c0_9 = arith.constant 0 : index
    %11 = vector.load %arg6[%c0_8, %c0_9] : memref<8x256xf32, #tpu.memory_space<vmem>>, vector<8x256xf32>
    tpu.vector_store %arg6[%c0_8, %c0_9], %10 {strides = array<i32>} : memref<8x256xf32, #tpu.memory_space<vmem>>, vector<8x256xf32>,
    %c0_i32_10 = arith.constant 0 : i32
    %12 = arith.cmpi eq, %arg1, %c0_i32_10 : i32
    %13 = arith.extui %12 : i1 to i32
    %c0_i32_11 = arith.constant 0 : i32
    %14 = arith.cmpi ne, %13, %c0_i32_11 : i32
    scf.if %14 {
      %c0_12 = arith.constant 0 : index
      %c0_13 = arith.constant 0 : index
      %15 = vector.load %arg6[%c0_12, %c0_13] : memref<8x256xf32, #tpu.memory_space<vmem>>, vector<8x256xf32>
      %16 = vector.extract_strided_slice %15 {offsets = [0, 0], sizes = [8, 128], strides = [1, 1]} : vector<8x256xf32> to vector<8x128xf32>
      %17 = vector.extract_strided_slice %15 {offsets = [0, 128], sizes = [8, 128], strides = [1, 1]} : vector<8x256xf32> to vector<8x128xf32>
      %18 = arith.addf %16, %17 : vector<8x128xf32>
      %19 = vector.shape_cast %18 : vector<8x128xf32> to vector<1x8x128xf32>
      %c0_14 = arith.constant 0 : index
      %c0_15 = arith.constant 0 : index
      %c0_16 = arith.constant 0 : index
      %20 = vector.load %arg5[%c0_14, %c0_15, %c0_16] : memref<1x8x128xf32, #tpu.memory_space<vmem>>, vector<1x8x128xf32>
      tpu.vector_store %arg5[%c0_14, %c0_15, %c0_16], %19 {strides = array<i32>} : memref<1x8x128xf32, #tpu.memory_space<vmem>>, vector<1x8x128xf32>,
    } else {
    }
    return
  }
  func.func @transform_0(%arg0: i32, %arg1: i32) -> (i32, i32) {
    %c0_i32 = arith.constant 0 : i32
    return %arg0, %arg1 : i32, i32
  }
  func.func @transform_1(%arg0: i32, %arg1: i32) -> (i32, i32) {
    %c0_i32 = arith.constant 0 : i32
    return %arg0, %arg1 : i32, i32
  }
  func.func @transform_2(%arg0: i32, %arg1: i32) -> (i32, i32) {
    %c0_i32 = arith.constant 0 : i32
    return %arg0, %arg1 : i32, i32
  }
  func.func @transform_3(%arg0: i32, %arg1: i32) -> (i32, i32, i32) {
    %c0_i32 = arith.constant 0 : i32
    %c0_i32_0 = arith.constant 0 : i32
    %c0_i32_1 = arith.constant 0 : i32
    return %arg0, %c0_i32, %c0_i32_0 : i32, i32, i32
  }
}

</mosaic_0001>

<llo_original>
// kernel: tpu_custom_call.1
$region0: #{tpu_custom_call.1}
  #allocation0 [shape = 'u32[]', space=smem, size = 0x4, offset = 0x4, fixed_abs, tag = 'smem constant byte address 0x4 - core index']
  #allocation1 [shape = 'u32[72,128]{1,0:T(1,128)}', space=vmem, size = 0x9000, scoped, tag = 'internal scratch']
  #allocation2 [shape = 'f32[8,256]{1,0:T(8,128)}', space=vmem, size = 0x2000, scoped, tag = 'scratch operand']
  %s0 = inlined_call_operand.hbm [shape: f32[16,256], index: 0, kind: input, shape index: {}]
  %s1 = inlined_call_operand.hbm [shape: f32[16,256], index: 1, kind: input, shape index: {}]
  %s2 = inlined_call_operand.hbm [shape: f32[16,256], index: 2, kind: input, shape index: {}]
  %s3 = inlined_call_operand.hbm [shape: f32[2,8,128], index: 3, kind: output, shape index: {}]
  %s4 = sld [smem:[#allocation0]]
  $region65: #{tpu_custom_call.1} parent=0
    _
  %s6 = ssub.s32 1, %s4
  %s7 = scalar_select 0, %s6, %s4
  $region1: #{tpu_custom_call.1} parent=0
    #allocation3 [shape = 'u8[16384]{0}', space=vmem, size = 0x4000, scoped, tag = 'input window, operand 0']
    #allocation4 [shape = 's32[2]{0}', space=sflag, size = 0x8, scoped, tag = 'scoped memory for tpu_custom_call.1']
    #allocation5 [shape = 's32[2]{0}', space=sflag, size = 0x8, scoped, tag = 'scoped memory for tpu_custom_call.1']
    #allocation6 [shape = 'u8[16384]{0}', space=vmem, size = 0x4000, scoped, tag = 'input window, operand 1']
    #allocation7 [shape = 's32[2]{0}', space=sflag, size = 0x8, scoped, tag = 'scoped memory for tpu_custom_call.1']
    #allocation8 [shape = 'u8[16384]{0}', space=vmem, size = 0x4000, scoped, tag = 'input window, operand 2']
    #allocation9 [shape = 'u8[8192]{0}', space=vmem, size = 0x2000, scoped, tag = 'output window, operand 0']
    %8 = vsyncpa [#allocation4], 0
    %s9 = scalar_lea.sflag [#allocation4], 1
    %10 = vsyncpa %s9, 0
    %11 = vsyncpa [#allocation7], 0
    %s12 = scalar_lea.sflag [#allocation7], 1
    %13 = vsyncpa %s12, 0
    %14 = vsyncpa [#allocation5], 0
    %s15 = scalar_lea.sflag [#allocation5], 1
    %16 = vsyncpa %s15, 0
    loop: start=0, step=1, limit=4
    $region2: #{tpu_custom_call.1} parent=1 // loop_pre_header
      _
    $region3: #{tpu_custom_call.1} parent=1 // loop_header
      %s18 = sphi 0, %s22
      %p19 = scmp.ge.s32.totalorder %s18, 4
      %s25 = sphi 0, %s37
      %s26 = sphi 0, %s33
      %s27 = sphi 0, %s25
      %s28 = sphi 0, %s26
      %s29 = sphi 0, %s27
      %s30 = sphi 0, %s28
      %s42 = sphi 0, %s44
      %s45 = sphi 0, %s42
      %s46 = sphi 0, %s45
      %s62 = sphi 0, %s46
      %s70 = sphi 0, %s72
      %s73 = sphi 0, %s70
      %s74 = sphi 0, %s73
      %s90 = sphi 0, %s74
      %s98 = sphi 0, %s100
      %s101 = sphi 0, %s98
      %s102 = sphi 0, %s101
      %s118 = sphi 0, %s102
      %s124 = sphi 0, %s126
      %s127 = sphi 0, %s124
      %s128 = sphi 0, %s127
      %s144 = sphi 0, %s128
    $region4: #{tpu_custom_call.1} parent=1 // loop_header_branch
      %21 = sbr.rel (%p19) target = $region8
    $region5: #{tpu_custom_call.1} parent=1 // loop_body
      %s23 = ssub.s32 %s18, 1
      %s24 = ssub.s32 %s18, 2
      %s31 = sadd.s32 1, %s26
      %p32 = scmp.ge.s32.totalorder %s31, 1
      %s33 = scalar_select %p32, 0, %s31
      %s34 = sadd.s32 1, %s25
      %s35 = scalar_select %p32, %s34, %s25
      %p36 = scmp.ge.s32.totalorder %s35, 2
      %s37 = scalar_select %p36, 0, %s35
      %s38 = ssub.s32 %s25, %s37
      %s39 = ssub.s32 %s26, %s33
      %s40 = sor.u32 %s38, %s39
      %p41 = scmp.eq.s32.totalorder %s40, 0
      %s43 = sadd.s32 %s42, 1
      %s44 = scalar_select %p41, %s42, %s43
      %p47 = pneg %p41
      %p48 = scmp.eq.s32.totalorder %s18, 1
      %p49 = por %p47, %p48
      %p50 = scmp.ne.s32.totalorder %s42, %s45
      %p51 = scmp.eq.s32.totalorder %s18, 0
      %p52 = por %p50, %p51
      %p53 = scmp.ne.s32.totalorder %s42, %s45
      %p54 = scmp.eq.s32.totalorder %s23, 1
      %p55 = por %p53, %p54
      %p56 = scmp.ne.s32.totalorder %s45, %s46
      %p57 = scmp.eq.s32.totalorder %s23, 0
      %p58 = por %p56, %p57
      %p59 = scmp.ne.s32.totalorder %s45, %s46
      %p60 = scmp.eq.s32.totalorder %s24, 1
      %p61 = por %p59, %p60
      %p63 = scmp.ne.s32.totalorder %s46, %s62
      %p64 = scmp.eq.s32.totalorder %s24, 0
      %p65 = por %p63, %p64
      %s66 = ssub.s32 %s25, %s37
      %s67 = ssub.s32 %s26, %s33
      %s68 = sor.u32 %s66, %s67
      %p69 = scmp.eq.s32.totalorder %s68, 0
      %s71 = sadd.s32 %s70, 1
      %s72 = scalar_select %p69, %s70, %s71
      %p75 = pneg %p69
      %p76 = scmp.eq.s32.totalorder %s18, 1
      %p77 = por %p75, %p76
      %p78 = scmp.ne.s32.totalorder %s70, %s73
      %p79 = scmp.eq.s32.totalorder %s18, 0
      %p80 = por %p78, %p79
      %p81 = scmp.ne.s32.totalorder %s70, %s73
      %p82 = scmp.eq.s32.totalorder %s23, 1
      %p83 = por %p81, %p82
      %p84 = scmp.ne.s32.totalorder %s73, %s74
      %p85 = scmp.eq.s32.totalorder %s23, 0
      %p86 = por %p84, %p85
      %p87 = scmp.ne.s32.totalorder %s73, %s74
      %p88 = scmp.eq.s32.totalorder %s24, 1
      %p89 = por %p87, %p88
      %p91 = scmp.ne.s32.totalorder %s74, %s90
      %p92 = scmp.eq.s32.totalorder %s24, 0
      %p93 = por %p91, %p92
      %s94 = ssub.s32 %s25, %s37
      %s95 = ssub.s32 %s26, %s33
      %s96 = sor.u32 %s94, %s95
      %p97 = scmp.eq.s32.totalorder %s96, 0
      %s99 = sadd.s32 %s98, 1
      %s100 = scalar_select %p97, %s98, %s99
      %p103 = pneg %p97
      %p104 = scmp.eq.s32.totalorder %s18, 1
      %p105 = por %p103, %p104
      %p106 = scmp.ne.s32.totalorder %s98, %s101
      %p107 = scmp.eq.s32.totalorder %s18, 0
      %p108 = por %p106, %p107
      %p109 = scmp.ne.s32.totalorder %s98, %s101
      %p110 = scmp.eq.s32.totalorder %s23, 1
      %p111 = por %p109, %p110
      %p112 = scmp.ne.s32.totalorder %s101, %s102
      %p113 = scmp.eq.s32.totalorder %s23, 0
      %p114 = por %p112, %p113
      %p115 = scmp.ne.s32.totalorder %s101, %s102
      %p116 = scmp.eq.s32.totalorder %s24, 1
      %p117 = por %p115, %p116
      %p119 = scmp.ne.s32.totalorder %s102, %s118
      %p120 = scmp.eq.s32.totalorder %s24, 0
      %p121 = por %p119, %p120
      %s122 = ssub.s32 %s25, %s37
      %p123 = scmp.eq.s32.totalorder %s122, 0
      %s125 = sadd.s32 %s124, 1
      %s126 = scalar_select %p123, %s124, %s125
      %p129 = pneg %p123
      %p130 = scmp.eq.s32.totalorder %s18, 1
      %p131 = por %p129, %p130
      %p132 = scmp.ne.s32.totalorder %s124, %s127
      %p133 = scmp.eq.s32.totalorder %s18, 0
      %p134 = por %p132, %p133
      %p135 = scmp.ne.s32.totalorder %s124, %s127
      %p136 = scmp.eq.s32.totalorder %s23, 1
      %p137 = por %p135, %p136
      %p138 = scmp.ne.s32.totalorder %s127, %s128
      %p139 = scmp.eq.s32.totalorder %s23, 0
      %p140 = por %p138, %p139
      %p141 = scmp.ne.s32.totalorder %s127, %s128
      %p142 = scmp.eq.s32.totalorder %s24, 1
      %p143 = por %p141, %p142
      %p145 = scmp.ne.s32.totalorder %s128, %s144
      %p146 = scmp.eq.s32.totalorder %s24, 0
      %p147 = por %p145, %p146
      %p148 = scmp.le.s32.totalorder 1, %s18
      %p149 = scmp.lt.s32.totalorder %s18, 3
      %p150 = pnand %p148, %p149
      %p151 = pneg %p150
      // Predicated region
      $region9: #{tpu_custom_call.1} parent=5 // pred_check
        _
      $region10: #{tpu_custom_call.1} parent=5 // pred_check_branch
        %153 = sbr.rel (%p150) target = $region12
      $region11: #{tpu_custom_call.1} parent=5 // pred_region
        %s154 = ssub.s32 %s18, 1
      $region12: #{tpu_custom_call.1} parent=5 // pred_fallthru
        _
      %p155 = scmp.lt.s32.totalorder %s18, 2
      // Predicated region
      $region13: #{tpu_custom_call.1} parent=5 // pred_check
        %p156 = pneg %p155
      $region14: #{tpu_custom_call.1} parent=5 // pred_check_branch
        %158 = sbr.rel (%p156) target = $region16
      $region15: #{tpu_custom_call.1} parent=5 // pred_region
        // Predicated region
        $region17: #{tpu_custom_call.1} parent=15 // pred_check
          %p159 = pneg %p52
        $region18: #{tpu_custom_call.1} parent=15 // pred_check_branch
          %161 = sbr.rel (%p159) target = $region20
        $region19: #{tpu_custom_call.1} parent=15 // pred_region
          %s162 = sand.u32 %s42, 1
          %s163 = scalar_lea.sflag [#allocation4], %s162
          %s164 = sand.u32 %s42, 1
          %s165 = smul.addr %s164, 16
          %s166 = scalar_lea.vmem [#allocation3], %s165
          %s167 = smul.u32 2, %s26
          %169 = vsyncadd %s163, 0
          %s170 = smul.addr %s25, 2
          %s171 = sadd.s32 %s167, %s170
          %s172 = smul.addr %s171, 8
          %s173 = scalar_lea.hbm %s0, %s172
          %s175 = sshll.u32 %s173, 4
          %s176 = int_to_ptr.hbm [resolvable:$true] %s175
          %s177 = sshll.u32 %s166, 4
          %s178 = int_to_ptr.vmem [resolvable:$true] %s177
          %180 = dma.hbm_to_vmem [thread:$0]  %s176, 256, %s178, %s163
        $region20: #{tpu_custom_call.1} parent=15 // pred_fallthru
          _
        // Predicated region
        $region21: #{tpu_custom_call.1} parent=15 // pred_check
          %p181 = pneg %p80
        $region22: #{tpu_custom_call.1} parent=15 // pred_check_branch
          %183 = sbr.rel (%p181) target = $region24
        $region23: #{tpu_custom_call.1} parent=15 // pred_region
          %s184 = sand.u32 %s18, 1
          %s185 = scalar_lea.sflag [#allocation7], %s184
          %s186 = sand.u32 %s70, 1
          %s187 = smul.addr %s186, 16
          %s188 = scalar_lea.vmem [#allocation6], %s187
          %s189 = smul.u32 2, %s26
          %191 = vsyncadd %s185, 0
          %s192 = smul.addr %s25, 2
          %s193 = sadd.s32 %s189, %s192
          %s194 = smul.addr %s193, 8
          %s195 = scalar_lea.hbm %s1, %s194
          %s197 = sshll.u32 %s195, 4
          %s198 = int_to_ptr.hbm [resolvable:$true] %s197
          %s199 = sshll.u32 %s188, 4
          %s200 = int_to_ptr.vmem [resolvable:$true] %s199
          %202 = dma.hbm_to_vmem [thread:$0]  %s198, 256, %s200, %s185
        $region24: #{tpu_custom_call.1} parent=15 // pred_fallthru
          _
        // Predicated region
        $region25: #{tpu_custom_call.1} parent=15 // pred_check
          %p203 = pneg %p108
        $region26: #{tpu_custom_call.1} parent=15 // pred_check_branch
          %205 = sbr.rel (%p203) target = $region28
        $region27: #{tpu_custom_call.1} parent=15 // pred_region
          %s206 = sand.u32 %s18, 1
          %s207 = scalar_lea.sflag [#allocation7], %s206
          %s208 = sand.u32 %s98, 1
          %s209 = smul.addr %s208, 16
          %s210 = scalar_lea.vmem [#allocation8], %s209
          %s211 = smul.u32 2, %s26
          %213 = vsyncadd %s207, 0
          %s214 = smul.addr %s25, 2
          %s215 = sadd.s32 %s211, %s214
          %s216 = smul.addr %s215, 8
          %s217 = scalar_lea.hbm %s2, %s216
          %s219 = sshll.u32 %s217, 4
          %s220 = int_to_ptr.hbm [resolvable:$true] %s219
          %s221 = sshll.u32 %s210, 4
          %s222 = int_to_ptr.vmem [resolvable:$true] %s221
          %224 = dma.hbm_to_vmem [thread:$0]  %s220, 256, %s222, %s207
        $region28: #{tpu_custom_call.1} parent=15 // pred_fallthru
          _
      $region16: #{tpu_custom_call.1} parent=5 // pred_fallthru
        _
      %p225 = scmp.le.s32.totalorder 1, %s18
      %p226 = scmp.lt.s32.totalorder %s18, 3
      %p227 = pnand %p225, %p226
      %p228 = pneg %p227
      // Predicated region
      $region29: #{tpu_custom_call.1} parent=5 // pred_check
        _
      $region30: #{tpu_custom_call.1} parent=5 // pred_check_branch
        %230 = sbr.rel (%p227) target = $region32
      $region31: #{tpu_custom_call.1} parent=5 // pred_region
        %s231 = ssub.s32 %s18, 1
        %s232 = sand.u32 %s45, 1
        %s233 = scalar_lea.sflag [#allocation4], %s232
        %s234 = sand.u32 %s45, 1
        %s235 = smul.addr %s234, 16
        %s236 = scalar_lea.vmem [#allocation3], %s235
        // Predicated region
        $region33: #{tpu_custom_call.1} parent=31 // pred_check
          %p237 = pneg %p58
        $region34: #{tpu_custom_call.1} parent=31 // pred_check_branch
          %239 = sbr.rel (%p237) target = $region36
        $region35: #{tpu_custom_call.1} parent=31 // pred_region
          %241 = dma.done %s233, 256
        $region36: #{tpu_custom_call.1} parent=31 // pred_fallthru
          _
        %s242 = sand.u32 %s23, 1
        %s243 = scalar_lea.sflag [#allocation7], %s242
        %s244 = sand.u32 %s73, 1
        %s245 = smul.addr %s244, 16
        %s246 = scalar_lea.vmem [#allocation6], %s245
        // Predicated region
        $region37: #{tpu_custom_call.1} parent=31 // pred_check
          %p247 = pneg %p86
        $region38: #{tpu_custom_call.1} parent=31 // pred_check_branch
          %249 = sbr.rel (%p247) target = $region40
        $region39: #{tpu_custom_call.1} parent=31 // pred_region
          %251 = dma.done %s243, 256
        $region40: #{tpu_custom_call.1} parent=31 // pred_fallthru
          _
        %s252 = sand.u32 %s23, 1
        %s253 = scalar_lea.sflag [#allocation7], %s252
        %s254 = sand.u32 %s101, 1
        %s255 = smul.addr %s254, 16
        %s256 = scalar_lea.vmem [#allocation8], %s255
        // Predicated region
        $region41: #{tpu_custom_call.1} parent=31 // pred_check
          %p257 = pneg %p114
        $region42: #{tpu_custom_call.1} parent=31 // pred_check_branch
          %259 = sbr.rel (%p257) target = $region44
        $region43: #{tpu_custom_call.1} parent=31 // pred_region
          %261 = dma.done %s253, 256
        $region44: #{tpu_custom_call.1} parent=31 // pred_fallthru
          _
        %s262 = sand.u32 %s45, 1
        %s263 = scalar_lea.sflag [#allocation4], %s262
        %s264 = sand.u32 %s45, 1
        %s265 = smul.addr %s264, 16
        %s266 = scalar_lea.vmem [#allocation3], %s265
        %p267 = pneg %p58
        %p268 = pneg %p55
        %s269 = sand.u32 %s23, 1
        %s270 = scalar_lea.sflag [#allocation7], %s269
        %s271 = sand.u32 %s73, 1
        %s272 = smul.addr %s271, 16
        %s273 = scalar_lea.vmem [#allocation6], %s272
        %p274 = pneg %p86
        %p275 = pneg %p83
        %s276 = sand.u32 %s23, 1
        %s277 = scalar_lea.sflag [#allocation7], %s276
        %s278 = sand.u32 %s101, 1
        %s279 = smul.addr %s278, 16
        %s280 = scalar_lea.vmem [#allocation8], %s279
        %p281 = pneg %p114
        %p282 = pneg %p111
        %p283 = pneg %p140
        %p284 = pneg %p137
        %s285 = sand.u32 %s127, 1
        %s286 = scalar_lea.sflag [#allocation5], %s285
        %s287 = sand.u32 %s127, 1
        %s288 = smul.addr %s287, 8
        %s289 = scalar_lea.vmem [#allocation9], %s288
        %s290 = smul.u32 2, %s28
        %s291 = smul.u32 2, %s28
        %s292 = smul.u32 2, %s28
        %p293 = scmp.eq.s32.totalorder %s28, 0
        // Predicated region
        $region45: #{tpu_custom_call.1} parent=31 // pred_check
          %p294 = pneg %p293
        $region46: #{tpu_custom_call.1} parent=31 // pred_check_branch
          %296 = sbr.rel (%p294) target = $region48
        $region47: #{tpu_custom_call.1} parent=31 // pred_region
          %297 = vst [vmem:[#allocation2] sm:$0xff] 0.0
          %298 = vst [vmem:[#allocation2 + $0x8] sm:$0xff] 0.0
        $region48: #{tpu_custom_call.1} parent=31 // pred_fallthru
          _
        %v299 = vld [vmem:[%s236] sm:$0xff]
        %v300 = vld [vmem:[%s236 + $0x8] sm:$0xff]
        %v301 = vld [vmem:[%s246] sm:$0xff]
        %v302 = vld [vmem:[%s246 + $0x8] sm:$0xff]
        %v303 = vld [vmem:[%s256] sm:$0xff]
        %v304 = vld [vmem:[%s256 + $0x8] sm:$0xff]
        %v305 = vsub.f32 %v301, %v299
        %v306 = vsub.f32 %v302, %v300
        %v307 = vmul.f32 %v303, %v305
        %v308 = vmul.f32 %v304, %v306
        %v309 = vmul.f32 %v307, %v307
        %v310 = vmul.f32 %v308, %v308
        %v311 = vld [vmem:[#allocation2] sm:$0xff]
        %v312 = vld [vmem:[#allocation2 + $0x8] sm:$0xff]
        %v313 = vadd.f32 %v311, %v309
        %v314 = vadd.f32 %v312, %v310
        %315 = vst [vmem:[#allocation2] sm:$0xff] %v313
        %316 = vst [vmem:[#allocation2 + $0x8] sm:$0xff] %v314
        // Predicated region
        $region49: #{tpu_custom_call.1} parent=31 // pred_check
          %p317 = pneg %p293
        $region50: #{tpu_custom_call.1} parent=31 // pred_check_branch
          %319 = sbr.rel (%p317) target = $region52
        $region51: #{tpu_custom_call.1} parent=31 // pred_region
          %v320 = vld [vmem:[#allocation2] sm:$0xff]
          %v321 = vld [vmem:[#allocation2 + $0x8] sm:$0xff]
          %v322 = vadd.f32 %v320, %v321
          %323 = vst [vmem:[%s289] sm:$0xff] %v322
        $region52: #{tpu_custom_call.1} parent=31 // pred_fallthru
          _
        %s324 = sand.u32 %s127, 1
        %s325 = scalar_lea.sflag [#allocation5], %s324
        %s326 = sand.u32 %s127, 1
        %s327 = smul.addr %s326, 8
        %s328 = scalar_lea.vmem [#allocation9], %s327
        // Predicated region
        $region53: #{tpu_custom_call.1} parent=31 // pred_check
          %p329 = pneg %p137
        $region54: #{tpu_custom_call.1} parent=31 // pred_check_branch
          %331 = sbr.rel (%p329) target = $region56
        $region55: #{tpu_custom_call.1} parent=31 // pred_region
          %333 = vsyncadd %s325, 0
          %s334 = smul.addr %s27, 8
          %s335 = scalar_lea.hbm %s3, %s334
          %s337 = sshll.u32 %s328, 4
          %s338 = int_to_ptr.vmem [resolvable:$true] %s337
          %s339 = sshll.u32 %s335, 4
          %s340 = int_to_ptr.hbm [resolvable:$true] %s339
          %342 = dma.vmem_to_hbm [thread:$0]  %s338, 128, %s340, %s325
        $region56: #{tpu_custom_call.1} parent=31 // pred_fallthru
          _
      $region32: #{tpu_custom_call.1} parent=5 // pred_fallthru
        _
      %p343 = scmp.le.s32.totalorder 2, %s18
      // Predicated region
      $region57: #{tpu_custom_call.1} parent=5 // pred_check
        %p344 = pneg %p343
      $region58: #{tpu_custom_call.1} parent=5 // pred_check_branch
        %346 = sbr.rel (%p344) target = $region60
      $region59: #{tpu_custom_call.1} parent=5 // pred_region
        %s347 = ssub.s32 %s18, 2
        // Predicated region
        $region61: #{tpu_custom_call.1} parent=59 // pred_check
          %p348 = pneg %p143
        $region62: #{tpu_custom_call.1} parent=59 // pred_check_branch
          %350 = sbr.rel (%p348) target = $region64
        $region63: #{tpu_custom_call.1} parent=59 // pred_region
          %s351 = sand.u32 %s128, 1
          %s352 = scalar_lea.sflag [#allocation5], %s351
          %s353 = sand.u32 %s128, 1
          %s354 = smul.addr %s353, 8
          %s355 = scalar_lea.vmem [#allocation9], %s354
          %357 = dma.done %s352, 128
        $region64: #{tpu_custom_call.1} parent=59 // pred_fallthru
          _
      $region60: #{tpu_custom_call.1} parent=5 // pred_fallthru
        _
    $region6: #{tpu_custom_call.1} parent=1 // loop_footer
      %s22 = sadd.s32 1, %s18
    $region7: #{tpu_custom_call.1} parent=1 // loop_footer_branch
      %17 = sbr.rel target = $region3
    $region8: #{tpu_custom_call.1} parent=1 // loop_exit
      _
    %358 = vsyncpa [#allocation4], 1
    %s359 = scalar_lea.sflag [#allocation4], 1
    %360 = vsyncpa %s359, 1
    %361 = vsyncpa [#allocation7], 1
    %s362 = scalar_lea.sflag [#allocation7], 1
    %363 = vsyncpa %s362, 1
    %364 = vsyncpa [#allocation5], 1
    %s365 = scalar_lea.sflag [#allocation5], 1
    %366 = vsyncpa %s365, 1

</llo_original>
